<compile_context>
chip_gen: v5e
topology: v5e:2x2
jax: 0.10.0
libtpu: 0.0.40
codegen_flags: <defaults>
</compile_context>

<pallas_src>
import functools

import numpy as np

import jax
import jax.numpy as jnp
from jax import lax
from jax.experimental import pallas as pl
from jax.experimental.pallas import tpu as pltpu


def _round_up(x, m):
    return (x + m - 1) // m * m


def _sublane_multiple(dtype):
    # Rows per full 32-bit sublane tile: f32 -> 8, bf16 -> 16, int8 -> 32.
    return 8 * max(1, 4 // jnp.dtype(dtype).itemsize)


@functools.lru_cache(maxsize=None)
def _roll_sign_for_device(device_kind):
    """Calibrate pltpu.roll's rotation direction for this device kind.

    Returns +1 if pltpu.roll matches jnp.roll (element i -> i+shift), -1 if it
    rotates the other way, None if it cannot be used (fallback to slice+concat).
    """
    del device_kind  # cache key only
    try:
        def probe(x_ref, o_ref):
            o_ref[...] = pltpu.roll(x_ref[...], 200, axis=1)

        x = np.arange(8 * 256, dtype=np.float32).reshape(8, 256)
        y = np.asarray(
            pl.pallas_call(
                probe, out_shape=jax.ShapeDtypeStruct((8, 256), jnp.float32)
            )(jnp.asarray(x))
        )
        if np.array_equal(y, np.roll(x, 200, axis=1)):
            return 1
        if np.array_equal(y, np.roll(x, -200, axis=1)):
            return -1
        return None
    except Exception:
        return None


def _pltpu_roll_sign():
    try:
        kind = jax.devices()[0].device_kind
    except Exception:
        kind = "<unknown>"
    return _roll_sign_for_device(kind)


def _make_shift_lanes(roll_sign):
    def shift_lanes(x, s):
        # out[..., q] = x[..., (q + s) % n]   (flat-lane shift of one conv tap)
        n = x.shape[-1]
        s = s % n
        if s == 0:
            return x
        if roll_sign is not None:
            return pltpu.roll(x, (-roll_sign * s) % n, axis=1)  # XLU lane rotate
        # Fallback only (roll direction probe failed): two lane slices + concat.
        return jnp.concatenate([x[:, s:], x[:, :s]], axis=1)

    return shift_lanes


def _make_fused_kernel(tap_shifts, cin_p, roll_sign):
    """Small-Cin path: write every shifted tap into one VMEM scratch (no concat
    copy) and run a single fused MXU matmul (Cout_t, KK*Cin_p)@(KK*Cin_p, HWp)."""
    shift_lanes = _make_shift_lanes(roll_sign)

    def kernel(x_ref, w_ref, b_ref, o_ref, patches_ref):
        # x_ref: (1, Cin_p, HWp) compute dtype (bf16 by default) - halo-padded
        # w_ref: (Cout_t, KK*Cin_p) compute dtype (BN scale folded in)
        # b_ref: (Cout_t, 1) f32 folded BN shift
        # o_ref: (1, Cout_t, HWp) io dtype
        # patches_ref: VMEM scratch (KK*Cin_p, HWp) compute dtype
        x = x_ref[0]
        for t, s in enumerate(tap_shifts):
            patches_ref[pl.ds(t * cin_p, cin_p), :] = shift_lanes(x, s)
        acc = jnp.dot(w_ref[...], patches_ref[...],
                      preferred_element_type=jnp.float32)
        # Epilogue (shift + ReLU) kept in f32 (v5e has no native bf16 VPU).
        o_ref[0] = jnp.maximum(acc + b_ref[...], 0.0).astype(o_ref.dtype)

    return kernel


def _make_per_tap_kernel(tap_shifts, roll_sign):
    """Large-Cin path: per-tap MXU accumulation; peak VMEM ~ Cin_p*HWp + Cout_t*HWp
    instead of KK*Cin_p*HWp."""
    shift_lanes = _make_shift_lanes(roll_sign)

    def kernel(x_ref, w_ref, b_ref, o_ref):
        # x_ref: (1, Cin_p, HWp)      w_ref: (KK, Cout_t, Cin_p)
        # b_ref: (Cout_t, 1) f32      o_ref: (1, Cout_t, HWp)
        x = x_ref[0]
        acc = None
        for t, s in enumerate(tap_shifts):
            part = jnp.dot(w_ref[t], shift_lanes(x, s),
                           preferred_element_type=jnp.float32)
            acc = part if acc is None else acc + part
        o_ref[0] = jnp.maximum(acc + b_ref[...], 0.0).astype(o_ref.dtype)

    return kernel


def conv_layer_forward(x, weight, gamma, beta, running_mean, running_var, *,
                       stride=1, padding=0, groups=1, eps=1e-5,
                       io_dtype=jnp.bfloat16, compute_dtype=jnp.bfloat16,
                       cout_tile=256, vmem_limit_bytes=48 * 1024 * 1024):
    """ConvLayer forward: Conv2d(bias=False) -> BatchNorm2d(eval) -> ReLU.

    x:      (N, Cin, H, W)        NCHW (PyTorch layout)
    weight: (Cout, Cin, KH, KW)   nn.Conv2d weight layout
    Returns (N, Cout, H_out, W_out) in io_dtype.
    """
    if groups != 1:
        # TODO(synk): grouped / depthwise convolutions are not implemented.
        raise NotImplementedError("groups != 1 not supported by this Pallas kernel")

    N, Cin, H, W = x.shape
    Cout, Cin_w, KH, KW = weight.shape
    assert Cin_w == Cin
    H_out = (H + 2 * padding - KH) // stride + 1
    W_out = (W + 2 * padding - KW) // stride + 1
    assert H_out >= 1 and W_out >= 1

    # Halo-padded spatial, flattened into lanes. For a valid dense output lane
    # q = h*Wp + w (h <= Hp-KH, w <= Wp-KW), every tap read q + kh*Wp + kw stays
    # inside [0, Hp*Wp): no flat-buffer wraparound, no row wrap -> no masks needed.
    Hp, Wp = H + 2 * padding, W + 2 * padding
    HW_flat = Hp * Wp
    HWp = _round_up(HW_flat, 128)          # lane-dense (multiple of 128)
    KK = KH * KW

    Cin_p = _round_up(Cin, _sublane_multiple(compute_dtype))
    sub_o = _sublane_multiple(io_dtype)
    if Cout <= cout_tile:
        Cout_p = _round_up(Cout, sub_o)
        ct = Cout_p                         # single Cout block
    else:
        # TODO(synk): 128 would be the natural tile on v5e (4x128^2 MXU).
        Cout_p = _round_up(Cout, cout_tile)
        ct = cout_tile
    n_cb = Cout_p // ct

    f32 = jnp.float32
    # ---- fold BatchNorm (eval) into the conv weights + a per-channel shift ----
    inv_std = 1.0 / jnp.sqrt(running_var.astype(f32) + eps)
    scale = gamma.astype(f32) * inv_std                         # (Cout,)
    shift = beta.astype(f32) - running_mean.astype(f32) * scale
    w_fold = weight.astype(f32) * scale[:, None, None, None]    # (Cout, Cin, KH, KW)
    w_fold = jnp.pad(w_fold, ((0, Cout_p - Cout), (0, Cin_p - Cin), (0, 0), (0, 0)))
    shift_col = jnp.pad(shift, (0, Cout_p - Cout)).reshape(Cout_p, 1)

    # ---- activations: NCHW -> zero halo pad -> (N, Cin_p, HWp) in compute dtype ----
    x_flat = jnp.pad(x.astype(compute_dtype),
                     ((0, 0), (0, Cin_p - Cin),
                      (padding, padding), (padding, padding)))
    x_flat = x_flat.reshape(N, Cin_p, HW_flat)
    x_flat = jnp.pad(x_flat, ((0, 0), (0, 0), (0, HWp - HW_flat)))

    # per-tap flat lane shifts (all non-negative thanks to the halo pad)
    tap_shifts = tuple(kh * Wp + kw for kh in range(KH) for kw in range(KW))
    roll_sign = _pltpu_roll_sign()

    use_per_tap = Cin_p >= 128   # contraction per tap >= MXU dim -> per-tap accumulation

    if use_per_tap:
        # (KK, Cout_p, Cin_p): tap t = kh*KW + kw in the leading dim
        w_arr = jnp.transpose(w_fold, (2, 3, 0, 1)).reshape(KK, Cout_p, Cin_p)
        w_arr = w_arr.astype(compute_dtype)
        kernel = _make_per_tap_kernel(tap_shifts, roll_sign)
        w_spec = pl.BlockSpec((KK, ct, Cin_p), lambda n, cb: (0, cb, 0))
        scratch = []
    else:
        # (Cout_p, KK*Cin_p): column t*Cin_p + ci <-> weight[co, ci, kh, kw]
        w_arr = jnp.transpose(w_fold, (0, 2, 3, 1)).reshape(Cout_p, KK * Cin_p)
        w_arr = w_arr.astype(compute_dtype)
        kernel = _make_fused_kernel(tap_shifts, Cin_p, roll_sign)
        w_spec = pl.BlockSpec((ct, KK * Cin_p), lambda n, cb: (cb, 0))
        scratch = [pltpu.VMEM((KK * Cin_p, HWp), compute_dtype)]

    # Grid (N, Cout-blocks): N outer so the (large) activation block stays resident
    # while Cout tiles sweep; weights/shift blocks only re-fetch on index change.
    out_flat = pl.pallas_call(
        kernel,
        out_shape=jax.ShapeDtypeStruct((N, Cout_p, HWp), io_dtype),
        grid_spec=pltpu.PrefetchScalarGridSpec(
            num_scalar_prefetch=0,
            grid=(N, n_cb),
            in_specs=[
                pl.BlockSpec((1, Cin_p, HWp), lambda n, cb: (n, 0, 0)),
                w_spec,
                pl.BlockSpec((ct, 1), lambda n, cb: (cb, 0)),
            ],
            out_specs=pl.BlockSpec((1, ct, HWp), lambda n, cb: (n, cb, 0)),
            scratch_shapes=scratch,
        ),
        compiler_params=pltpu.CompilerParams(
            dimension_semantics=("parallel", "parallel"),
            vmem_limit_bytes=vmem_limit_bytes),
    )(x_flat, w_arr, shift_col)

    # dense stride-1 grid on the padded layout -> crop / subsample (one XLA slice)
    dense = out_flat[:, :Cout, :HW_flat].reshape(N, Cout, Hp, Wp)
    out = dense[:, :, :(H_out - 1) * stride + 1:stride,
                      :(W_out - 1) * stride + 1:stride]
    return out


def _reference(x, w_folded, shift, stride, padding):
    """Pure-JAX/XLA reference mirroring Conv2d(bias=False) -> BN(eval) -> ReLU."""
    y = lax.conv_general_dilated(
        x.astype(jnp.float32), w_folded.astype(jnp.float32),
        window_strides=(stride, stride),
        padding=((padding, padding), (padding, padding)),
        dimension_numbers=("NCHW", "OIHW", "NCHW"),
        precision=lax.Precision.HIGHEST)
    return jnp.maximum(y + shift.reshape(1, -1, 1, 1), 0.0)


if __name__ == "__main__":
    key = jax.random.PRNGKey(0)
    k_x, k_w, k_g, k_b, k_m, k_v = jax.random.split(key, 6)

    # ConvLayer(in_channels=4, out_channels=8, kernel_size=3, stride=1, padding=1)
    N, Cin, Cout, H, W, K = 2, 4, 8, 16, 16, 3

    x = jax.random.normal(k_x, (N, Cin, H, W), dtype=jnp.float32)
    weight = jax.random.normal(k_w, (Cout, Cin, K, K), dtype=jnp.float32) * 0.3
    gamma = jax.random.uniform(k_g, (Cout,), minval=0.5, maxval=1.5, dtype=jnp.float32)
    beta = jax.random.normal(k_b, (Cout,), dtype=jnp.float32) * 0.1
    running_mean = jax.random.normal(k_m, (Cout,), dtype=jnp.float32) * 0.1
    running_var = jax.random.uniform(k_v, (Cout,), minval=0.5, maxval=1.5, dtype=jnp.float32)

    inv_std = 1.0 / jnp.sqrt(running_var + 1e-5)
    scale = gamma * inv_std
    shift = beta - running_mean * scale
    w_fold = weight * scale[:, None, None, None]

    # --- A: f32 compute / f32 I/O, stride=1, padding=1 (tight check) ---
    out = conv_layer_forward(x, weight, gamma, beta, running_mean, running_var,
                             stride=1, padding=1,
                             io_dtype=jnp.float32, compute_dtype=jnp.float32)
    out = jax.block_until_ready(out)
    ref = _reference(x, w_fold, shift, 1, 1)
    assert out.shape == (N, Cout, H, W) and out.shape == ref.shape
    assert jnp.allclose(out, ref, atol=2e-3, rtol=2e-3), "f32 kernel mismatch"

    # --- B: default bf16 compute / bf16 I/O, checked vs bf16-rounded inputs ---
    out_bf = conv_layer_forward(x, weight, gamma, beta, running_mean, running_var,
                                stride=1, padding=1)
    out_bf = jax.block_until_ready(out_bf)
    x_r = x.astype(jnp.bfloat16).astype(jnp.float32)
    w_r = w_fold.astype(jnp.bfloat16).astype(jnp.float32)
    ref_bf = _reference(x_r, w_r, shift, 1, 1)
    assert out_bf.shape == (N, Cout, H, W)
    assert jnp.allclose(out_bf.astype(jnp.float32), ref_bf, atol=3e-2, rtol=3e-2), \
        "bf16 kernel mismatch"

    # --- C: stride=2 / padding=0 (dense grid + crop path), f32 ---
    out_s2 = conv_layer_forward(x, weight, gamma, beta, running_mean, running_var,
                                stride=2, padding=0,
                                io_dtype=jnp.float32, compute_dtype=jnp.float32)
    out_s2 = jax.block_until_ready(out_s2)
    ref_s2 = _reference(x, w_fold, shift, 2, 0)
    assert out_s2.shape == ref_s2.shape == (N, Cout, 7, 7)
    assert jnp.allclose(out_s2, ref_s2, atol=2e-3, rtol=2e-3), "stride-2 mismatch"

    # --- D: wide-Cin config exercising the per-tap accumulation path (bf16) ---
    N2, Cin2, Cout2, H2, W2 = 1, 128, 16, 8, 8
    kx2, kw2, kg2, kb2, km2, kv2 = jax.random.split(jax.random.PRNGKey(1), 6)
    x2 = jax.random.normal(kx2, (N2, Cin2, H2, W2), dtype=jnp.float32)
    w2 = jax.random.normal(kw2, (Cout2, Cin2, K, K), dtype=jnp.float32) * 0.05
    g2 = jax.random.uniform(kg2, (Cout2,), minval=0.5, maxval=1.5, dtype=jnp.float32)
    b2 = jax.random.normal(kb2, (Cout2,), dtype=jnp.float32) * 0.1
    m2 = jax.random.normal(km2, (Cout2,), dtype=jnp.float32) * 0.1
    v2 = jax.random.uniform(kv2, (Cout2,), minval=0.5, maxval=1.5, dtype=jnp.float32)
    out2 = conv_layer_forward(x2, w2, g2, b2, m2, v2, stride=1, padding=1)
    out2 = jax.block_until_ready(out2)
    inv2 = 1.0 / jnp.sqrt(v2 + 1e-5)
    sc2 = g2 * inv2
    sh2 = b2 - m2 * sc2
    wf2 = w2 * sc2[:, None, None, None]
    ref2 = _reference(x2.astype(jnp.bfloat16).astype(jnp.float32),
                      wf2.astype(jnp.bfloat16).astype(jnp.float32), sh2, 1, 1)
    assert out2.shape == (N2, Cout2, H2, W2)
    assert jnp.allclose(out2.astype(jnp.float32), ref2, atol=4e-2, rtol=4e-2), \
        "per-tap path mismatch"

    print("KERNEL_OK")
</pallas_src>

<mosaic_0001>
module attributes {stable_mosaic.version = 11 : i64} {
  func.func @probe(%arg0: memref<8x256xf32, #tpu.memory_space<vmem>>, %arg1: memref<8x256xf32, #tpu.memory_space<vmem>>) attributes {dimension_semantics = [], scalar_prefetch = 0 : i64, scratch_operands = 0 : i64, tpu.core_type = #tpu.core_type<tc>} {
    %c0 = arith.constant 0 : index
    %c0_0 = arith.constant 0 : index
    %0 = vector.load %arg0[%c0, %c0_0] : memref<8x256xf32, #tpu.memory_space<vmem>>, vector<8x256xf32>
    %c200_i32 = arith.constant 200 : i32
    %1 = tpu.dynamic_rotate %0 by %c200_i32 dim 1 : vector<8x256xf32>, i32 -> vector<8x256xf32>
    %c0_1 = arith.constant 0 : index
    %c0_2 = arith.constant 0 : index
    %2 = vector.load %arg1[%c0_1, %c0_2] : memref<8x256xf32, #tpu.memory_space<vmem>>, vector<8x256xf32>
    tpu.vector_store %arg1[%c0_1, %c0_2], %1 {strides = array<i32>} : memref<8x256xf32, #tpu.memory_space<vmem>>, vector<8x256xf32>,
    return
  }
}

module attributes {stable_mosaic.version = 11 : i64} {
  func.func @kernel(%arg0: i32, %arg1: i32, %arg2: memref<1x8x384xf32, #tpu.memory_space<vmem>>, %arg3: memref<8x72xf32, #tpu.memory_space<vmem>>, %arg4: memref<8x1xf32, #tpu.memory_space<vmem>>, %arg5: memref<1x8x384xf32, #tpu.memory_space<vmem>>, %arg6: memref<72x384xf32, #tpu.memory_space<vmem>>) attributes {dimension_semantics = [#tpu.dimension_semantics<parallel>, #tpu.dimension_semantics<parallel>], iteration_bounds = array<i64: 2, 1>, scalar_prefetch = 0 : i64, scratch_operands = 1 : i64, tpu.core_type = #tpu.core_type<tc>, window_params = [{transform_indices = @transform_0, window_bounds = array<i64: 1, 8, 384>}, {transform_indices = @transform_1, window_bounds = array<i64: 8, 72>}, {transform_indices = @transform_2, window_bounds = array<i64: 8, 1>}, {transform_indices = @transform_3, window_bounds = array<i64: 1, 8, 384>}]} {
    %c0 = arith.constant 0 : index
    %c0_0 = arith.constant 0 : index
    %c0_1 = arith.constant 0 : index
    %0 = vector.load %arg2[%c0, %c0_0, %c0_1] : memref<1x8x384xf32, #tpu.memory_space<vmem>>, vector<1x8x384xf32>
    %1 = vector.shape_cast %0 : vector<1x8x384xf32> to vector<8x384xf32>
    %c0_2 = arith.constant 0 : index
    %c0_3 = arith.constant 0 : index
    %2 = vector.load %arg6[%c0_2, %c0_3] : memref<72x384xf32, #tpu.memory_space<vmem>>, vector<8x384xf32>
    tpu.vector_store %arg6[%c0_2, %c0_3], %1 {strides = array<i32>} : memref<72x384xf32, #tpu.memory_space<vmem>>, vector<8x384xf32>,
    %3 = vector.extract_strided_slice %1 {offsets = [0, 1], sizes = [8, 383], strides = [1, 1]} : vector<8x384xf32> to vector<8x383xf32>
    %4 = vector.extract_strided_slice %1 {offsets = [0, 0], sizes = [8, 1], strides = [1, 1]} : vector<8x384xf32> to vector<8x1xf32>
    %5 = tpu.concatenate %3, %4 in 1 : vector<8x383xf32>, vector<8x1xf32> -> vector<8x384xf32>
    %c8 = arith.constant 8 : index
    %c0_4 = arith.constant 0 : index
    %6 = vector.load %arg6[%c8, %c0_4] : memref<72x384xf32, #tpu.memory_space<vmem>>, vector<8x384xf32>
    tpu.vector_store %arg6[%c8, %c0_4], %5 {strides = array<i32>} : memref<72x384xf32, #tpu.memory_space<vmem>>, vector<8x384xf32>,
    %7 = vector.extract_strided_slice %1 {offsets = [0, 2], sizes = [8, 382], strides = [1, 1]} : vector<8x384xf32> to vector<8x382xf32>
    %8 = vector.extract_strided_slice %1 {offsets = [0, 0], sizes = [8, 2], strides = [1, 1]} : vector<8x384xf32> to vector<8x2xf32>
    %9 = tpu.concatenate %7, %8 in 1 : vector<8x382xf32>, vector<8x2xf32> -> vector<8x384xf32>
    %c16 = arith.constant 16 : index
    %c0_5 = arith.constant 0 : index
    %10 = vector.load %arg6[%c16, %c0_5] : memref<72x384xf32, #tpu.memory_space<vmem>>, vector<8x384xf32>
    tpu.vector_store %arg6[%c16, %c0_5], %9 {strides = array<i32>} : memref<72x384xf32, #tpu.memory_space<vmem>>, vector<8x384xf32>,
    %11 = vector.extract_strided_slice %1 {offsets = [0, 18], sizes = [8, 366], strides = [1, 1]} : vector<8x384xf32> to vector<8x366xf32>
    %12 = vector.extract_strided_slice %1 {offsets = [0, 0], sizes = [8, 18], strides = [1, 1]} : vector<8x384xf32> to vector<8x18xf32>
    %13 = tpu.concatenate %11, %12 in 1 : vector<8x366xf32>, vector<8x18xf32> -> vector<8x384xf32>
    %c24 = arith.constant 24 : index
    %c0_6 = arith.constant 0 : index
    %14 = vector.load %arg6[%c24, %c0_6] : memref<72x384xf32, #tpu.memory_space<vmem>>, vector<8x384xf32>
    tpu.vector_store %arg6[%c24, %c0_6], %13 {strides = array<i32>} : memref<72x384xf32, #tpu.memory_space<vmem>>, vector<8x384xf32>,
    %15 = vector.extract_strided_slice %1 {offsets = [0, 19], sizes = [8, 365], strides = [1, 1]} : vector<8x384xf32> to vector<8x365xf32>
    %16 = vector.extract_strided_slice %1 {offsets = [0, 0], sizes = [8, 19], strides = [1, 1]} : vector<8x384xf32> to vector<8x19xf32>
    %17 = tpu.concatenate %15, %16 in 1 : vector<8x365xf32>, vector<8x19xf32> -> vector<8x384xf32>
    %c32 = arith.constant 32 : index
    %c0_7 = arith.constant 0 : index
    %18 = vector.load %arg6[%c32, %c0_7] : memref<72x384xf32, #tpu.memory_space<vmem>>, vector<8x384xf32>
    tpu.vector_store %arg6[%c32, %c0_7], %17 {strides = array<i32>} : memref<72x384xf32, #tpu.memory_space<vmem>>, vector<8x384xf32>,
    %19 = vector.extract_strided_slice %1 {offsets = [0, 20], sizes = [8, 364], strides = [1, 1]} : vector<8x384xf32> to vector<8x364xf32>
    %20 = vector.extract_strided_slice %1 {offsets = [0, 0], sizes = [8, 20], strides = [1, 1]} : vector<8x384xf32> to vector<8x20xf32>
    %21 = tpu.concatenate %19, %20 in 1 : vector<8x364xf32>, vector<8x20xf32> -> vector<8x384xf32>
    %c40 = arith.constant 40 : index
    %c0_8 = arith.constant 0 : index
    %22 = vector.load %arg6[%c40, %c0_8] : memref<72x384xf32, #tpu.memory_space<vmem>>, vector<8x384xf32>
    tpu.vector_store %arg6[%c40, %c0_8], %21 {strides = array<i32>} : memref<72x384xf32, #tpu.memory_space<vmem>>, vector<8x384xf32>,
    %23 = vector.extract_strided_slice %1 {offsets = [0, 36], sizes = [8, 348], strides = [1, 1]} : vector<8x384xf32> to vector<8x348xf32>
    %24 = vector.extract_strided_slice %1 {offsets = [0, 0], sizes = [8, 36], strides = [1, 1]} : vector<8x384xf32> to vector<8x36xf32>
    %25 = tpu.concatenate %23, %24 in 1 : vector<8x348xf32>, vector<8x36xf32> -> vector<8x384xf32>
    %c48 = arith.constant 48 : index
    %c0_9 = arith.constant 0 : index
    %26 = vector.load %arg6[%c48, %c0_9] : memref<72x384xf32, #tpu.memory_space<vmem>>, vector<8x384xf32>
    tpu.vector_store %arg6[%c48, %c0_9], %25 {strides = array<i32>} : memref<72x384xf32, #tpu.memory_space<vmem>>, vector<8x384xf32>,
    %27 = vector.extract_strided_slice %1 {offsets = [0, 37], sizes = [8, 347], strides = [1, 1]} : vector<8x384xf32> to vector<8x347xf32>
    %28 = vector.extract_strided_slice %1 {offsets = [0, 0], sizes = [8, 37], strides = [1, 1]} : vector<8x384xf32> to vector<8x37xf32>
    %29 = tpu.concatenate %27, %28 in 1 : vector<8x347xf32>, vector<8x37xf32> -> vector<8x384xf32>
    %c56 = arith.constant 56 : index
    %c0_10 = arith.constant 0 : index
    %30 = vector.load %arg6[%c56, %c0_10] : memref<72x384xf32, #tpu.memory_space<vmem>>, vector<8x384xf32>
    tpu.vector_store %arg6[%c56, %c0_10], %29 {strides = array<i32>} : memref<72x384xf32, #tpu.memory_space<vmem>>, vector<8x384xf32>,
    %31 = vector.extract_strided_slice %1 {offsets = [0, 38], sizes = [8, 346], strides = [1, 1]} : vector<8x384xf32> to vector<8x346xf32>
    %32 = vector.extract_strided_slice %1 {offsets = [0, 0], sizes = [8, 38], strides = [1, 1]} : vector<8x384xf32> to vector<8x38xf32>
    %33 = tpu.concatenate %31, %32 in 1 : vector<8x346xf32>, vector<8x38xf32> -> vector<8x384xf32>
    %c64 = arith.constant 64 : index
    %c0_11 = arith.constant 0 : index
    %34 = vector.load %arg6[%c64, %c0_11] : memref<72x384xf32, #tpu.memory_space<vmem>>, vector<8x384xf32>
    tpu.vector_store %arg6[%c64, %c0_11], %33 {strides = array<i32>} : memref<72x384xf32, #tpu.memory_space<vmem>>, vector<8x384xf32>,
    %c0_12 = arith.constant 0 : index
    %c0_13 = arith.constant 0 : index
    %35 = vector.load %arg3[%c0_12, %c0_13] : memref<8x72xf32, #tpu.memory_space<vmem>>, vector<8x72xf32>
    %c0_14 = arith.constant 0 : index
    %c0_15 = arith.constant 0 : index
    %36 = vector.load %arg6[%c0_14, %c0_15] : memref<72x384xf32, #tpu.memory_space<vmem>>, vector<72x384xf32>
    %cst = arith.constant dense<0.000000e+00> : vector<8x384xf32>
    %37 = tpu.matmul %35, %36, %cst {dimension_numbers = #tpu.dot_dimension_numbers<[1], [0], [0], [1], [0, 0, 1, 1], [], []>} : vector<8x72xf32>, vector<72x384xf32>, vector<8x384xf32> -> vector<8x384xf32>
    %c0_16 = arith.constant 0 : index
    %c0_17 = arith.constant 0 : index
    %38 = vector.load %arg4[%c0_16, %c0_17] : memref<8x1xf32, #tpu.memory_space<vmem>>, vector<8x1xf32>
    %39 = vector.broadcast %38 : vector<8x1xf32> to vector<8x384xf32>
    %40 = arith.addf %37, %39 : vector<8x384xf32>
    %cst_18 = arith.constant 0.000000e+00 : f32
    %41 = vector.broadcast %cst_18 : f32 to vector<8x384xf32>
    %42 = arith.maximumf %40, %41 : vector<8x384xf32>
    %c0_19 = arith.constant 0 : index
    %c0_20 = arith.constant 0 : index
    %c0_21 = arith.constant 0 : index
    %43 = vector.load %arg5[%c0_19, %c0_20, %c0_21] : memref<1x8x384xf32, #tpu.memory_space<vmem>>, vector<1x8x384xf32>
    %44 = vector.shape_cast %43 : vector<1x8x384xf32> to vector<8x384xf32>
    %45 = vector.shape_cast %42 : vector<8x384xf32> to vector<1x8x384xf32>
    tpu.vector_store %arg5[%c0_19, %c0_20, %c0_21], %45 {strides = array<i32>} : memref<1x8x384xf32, #tpu.memory_space<vmem>>, vector<1x8x384xf32>,
    return
  }
  func.func @transform_0(%arg0: i32, %arg1: i32) -> (i32, i32, i32) {
    %c0_i32 = arith.constant 0 : i32
    %c0_i32_0 = arith.constant 0 : i32
    %c0_i32_1 = arith.constant 0 : i32
    return %arg0, %c0_i32, %c0_i32_0 : i32, i32, i32
  }
  func.func @transform_1(%arg0: i32, %arg1: i32) -> (i32, i32) {
    %c0_i32 = arith.constant 0 : i32
    %c0_i32_0 = arith.constant 0 : i32
    return %arg1, %c0_i32 : i32, i32
  }
  func.func @transform_2(%arg0: i32, %arg1: i32) -> (i32, i32) {
    %c0_i32 = arith.constant 0 : i32
    %c0_i32_0 = arith.constant 0 : i32
    return %arg1, %c0_i32 : i32, i32
  }
  func.func @transform_3(%arg0: i32, %arg1: i32) -> (i32, i32, i32) {
    %c0_i32 = arith.constant 0 : i32
    %c0_i32_0 = arith.constant 0 : i32
    return %arg0, %arg1, %c0_i32 : i32, i32, i32
  }
}

</mosaic_0001>

<llo_original>
// kernel: tpu_custom_call.1
$region0: #{tpu_custom_call.1}
  #allocation0 [shape = 'u32[]', space=smem, size = 0x4, offset = 0x4, fixed_abs, tag = 'smem constant byte address 0x4 - core index']
  #allocation1 [shape = 'u32[72,128]{1,0:T(1,128)}', space=vmem, size = 0x9000, scoped, tag = 'internal scratch']
  %s0 = inlined_call_operand.hbm [shape: f32[8,256], index: 0, kind: input, shape index: {}]
  %s1 = inlined_call_operand.hbm [shape: f32[8,256], index: 1, kind: output, shape index: {}]
  %s2 = sld [smem:[#allocation0]]
  $region18: #{tpu_custom_call.1} parent=0
    _
  %s4 = ssub.s32 1, %s2
  %s5 = scalar_select 0, %s4, %s2
  $region1: #{tpu_custom_call.1} parent=0
    #allocation2 [shape = 'u8[8192]{0}', space=vmem, size = 0x2000, scoped, tag = 'input window, operand 0, single buffered']
    #allocation3 [shape = 's32[1]{0}', space=sflag, size = 0x4, scoped, tag = 'scoped memory for tpu_custom_call.1']
    #allocation4 [shape = 's32[1]{0}', space=sflag, size = 0x4, scoped, tag = 'scoped memory for tpu_custom_call.1']
    #allocation5 [shape = 'u8[8192]{0}', space=vmem, size = 0x2000, scoped, tag = 'output window, operand 0, single buffered']
    %6 = vsyncpa [#allocation3], 0
    %7 = vsyncpa [#allocation4], 0
    // Predicated region
    $region2: #{tpu_custom_call.1} parent=1 // pred_check
      _
    $region3: #{tpu_custom_call.1} parent=1 // pred_check_branch
      %9 = sbr.rel (0) target = $region5
    $region4: #{tpu_custom_call.1} parent=1 // pred_region
      %11 = vsyncadd [#allocation3], 0
      %s13 = sshll.u32 %s0, 4
      %s14 = int_to_ptr.hbm [resolvable:$true] %s13
      %s15 = sshll.u32 [#allocation2], 4
      %s16 = int_to_ptr.vmem [resolvable:$true] %s15
      %18 = dma.hbm_to_vmem [thread:$0]  %s14, 256, %s16, [#allocation3]
    $region5: #{tpu_custom_call.1} parent=1 // pred_fallthru
      _
    // Predicated region
    $region6: #{tpu_custom_call.1} parent=1 // pred_check
      _
    $region7: #{tpu_custom_call.1} parent=1 // pred_check_branch
      %20 = sbr.rel (0) target = $region9
    $region8: #{tpu_custom_call.1} parent=1 // pred_region
      %22 = dma.done [#allocation3], 256
    $region9: #{tpu_custom_call.1} parent=1 // pred_fallthru
      _
    %v23 = vld [vmem:[#allocation2] sm:$0xff]
    %v24 = vld [vmem:[#allocation2 + $0x8] sm:$0xff]
    %25 = vrot.lane.b32.xlu0 %v23, 72
    %v26 = vpop.permute.xlu0 %25
    %27 = vrot.lane.b32.xlu0 %v24, 72
    %v28 = vpop.permute.xlu0 %27
    %v29 = vlaneseq
    %v30 = vand.u32 %v29, 127
    %vm31 = vcmp.lt.s32.totalorder %v30, 72
    %v32 = vsel %vm31, %v26, %v28
    %v33 = vsel %vm31, %v28, %v26
    %34 = vst [vmem:[#allocation5] sm:$0xff] %v32
    %35 = vst [vmem:[#allocation5 + $0x8] sm:$0xff] %v33
    // Predicated region
    $region10: #{tpu_custom_call.1} parent=1 // pred_check
      _
    $region11: #{tpu_custom_call.1} parent=1 // pred_check_branch
      %37 = sbr.rel (0) target = $region13
    $region12: #{tpu_custom_call.1} parent=1 // pred_region
      %39 = vsyncadd [#allocation4], 0
      %s41 = sshll.u32 [#allocation5], 4
      %s42 = int_to_ptr.vmem [resolvable:$true] %s41
      %s43 = sshll.u32 %s1, 4
      %s44 = int_to_ptr.hbm [resolvable:$true] %s43
      %46 = dma.vmem_to_hbm [thread:$0]  %s42, 256, %s44, [#allocation4]
    $region13: #{tpu_custom_call.1} parent=1 // pred_fallthru
      _
    // Predicated region
    $region14: #{tpu_custom_call.1} parent=1 // pred_check
      _
    $region15: #{tpu_custom_call.1} parent=1 // pred_check_branch
      %48 = sbr.rel (0) target = $region17
    $region16: #{tpu_custom_call.1} parent=1 // pred_region
      %50 = dma.done [#allocation4], 256
    $region17: #{tpu_custom_call.1} parent=1 // pred_fallthru
      _
    %51 = vsyncpa [#allocation3], 1
    %52 = vsyncpa [#allocation4], 1

// kernel: tpu_custom_call.1
$region0: #{tpu_custom_call.1}
  #allocation0 [shape = 'u32[]', space=smem, size = 0x4, offset = 0x4, fixed_abs, tag = 'smem constant byte address 0x4 - core index']
  #allocation1 [shape = 'u32[72,128]{1,0:T(1,128)}', space=vmem, size = 0x9000, scoped, tag = 'internal scratch']
  #allocation2 [shape = 'f32[72,384]{1,0:T(8,128)}', space=vmem, size = 0x1b000, scoped, tag = 'scratch operand']
  %s0 = inlined_call_operand.hbm [shape: f32[2,8,384], index: 0, kind: input, shape index: {}]
  %s1 = inlined_call_operand.vmem [shape: f32[8,72], index: 1, kind: input, shape index: {}]
  %s2 = inlined_call_operand.vmem [shape: f32[8,1], index: 2, kind: input, shape index: {}]
  %s3 = inlined_call_operand.hbm [shape: f32[2,8,384], index: 3, kind: output, shape index: {}]
  %s4 = sld [smem:[#allocation0]]
  $region49: #{tpu_custom_call.1} parent=0
    _
  %s6 = ssub.s32 1, %s4
  %s7 = scalar_select 0, %s6, %s4
  $region1: #{tpu_custom_call.1} parent=0
    #allocation3 [shape = 'u8[24576]{0}', space=vmem, size = 0x6000, scoped, tag = 'input window, operand 0']
    #allocation4 [shape = 's32[2]{0}', space=sflag, size = 0x8, scoped, tag = 'scoped memory for tpu_custom_call.1']
    #allocation5 [shape = 's32[2]{0}', space=sflag, size = 0x8, scoped, tag = 'scoped memory for tpu_custom_call.1']
    #allocation6 [shape = 'u8[24576]{0}', space=vmem, size = 0x6000, scoped, tag = 'output window, operand 0']
    %8 = vsyncpa [#allocation4], 0
    %s9 = scalar_lea.sflag [#allocation4], 1
    %10 = vsyncpa %s9, 0
    %11 = vsyncpa [#allocation5], 0
    %s12 = scalar_lea.sflag [#allocation5], 1
    %13 = vsyncpa %s12, 0
    loop: start=0, step=1, limit=4
    $region2: #{tpu_custom_call.1} parent=1 // loop_pre_header
      _
    $region3: #{tpu_custom_call.1} parent=1 // loop_header
      %s15 = sphi 0, %s19
      %p16 = scmp.ge.s32.totalorder %s15, 4
      %s22 = sphi 0, %s34
      %s23 = sphi 0, %s30
      %s24 = sphi 0, %s22
      %s25 = sphi 0, %s23
      %s26 = sphi 0, %s24
      %s27 = sphi 0, %s25
      %s37 = sphi 0, %s39
      %s40 = sphi 0, %s37
      %s41 = sphi 0, %s40
      %s57 = sphi 0, %s41
      %s63 = sphi 0, %s65
      %s66 = sphi 0, %s63
      %s67 = sphi 0, %s66
      %s83 = sphi 0, %s67
      %s89 = sphi 0, %s91
      %s92 = sphi 0, %s89
      %s93 = sphi 0, %s92
      %s109 = sphi 0, %s93
      %s117 = sphi 0, %s119
      %s120 = sphi 0, %s117
      %s121 = sphi 0, %s120
      %s137 = sphi 0, %s121
    $region4: #{tpu_custom_call.1} parent=1 // loop_header_branch
      %18 = sbr.rel (%p16) target = $region8
    $region5: #{tpu_custom_call.1} parent=1 // loop_body
      %s20 = ssub.s32 %s15, 1
      %s21 = ssub.s32 %s15, 2
      %s28 = sadd.s32 1, %s23
      %p29 = scmp.ge.s32.totalorder %s28, 1
      %s30 = scalar_select %p29, 0, %s28
      %s31 = sadd.s32 1, %s22
      %s32 = scalar_select %p29, %s31, %s22
      %p33 = scmp.ge.s32.totalorder %s32, 2
      %s34 = scalar_select %p33, 0, %s32
      %s35 = ssub.s32 %s22, %s34
      %p36 = scmp.eq.s32.totalorder %s35, 0
      %s38 = sadd.s32 %s37, 1
      %s39 = scalar_select %p36, %s37, %s38
      %p42 = pneg %p36
      %p43 = scmp.eq.s32.totalorder %s15, 1
      %p44 = por %p42, %p43
      %p45 = scmp.ne.s32.totalorder %s37, %s40
      %p46 = scmp.eq.s32.totalorder %s15, 0
      %p47 = por %p45, %p46
      %p48 = scmp.ne.s32.totalorder %s37, %s40
      %p49 = scmp.eq.s32.totalorder %s20, 1
      %p50 = por %p48, %p49
      %p51 = scmp.ne.s32.totalorder %s40, %s41
      %p52 = scmp.eq.s32.totalorder %s20, 0
      %p53 = por %p51, %p52
      %p54 = scmp.ne.s32.totalorder %s40, %s41
      %p55 = scmp.eq.s32.totalorder %s21, 1
      %p56 = por %p54, %p55
      %p58 = scmp.ne.s32.totalorder %s41, %s57
      %p59 = scmp.eq.s32.totalorder %s21, 0
      %p60 = por %p58, %p59
      %s61 = ssub.s32 %s23, %s30
      %p62 = scmp.eq.s32.totalorder %s61, 0
      %s64 = sadd.s32 %s63, 1
      %s65 = scalar_select %p62, %s63, %s64
      %p68 = pneg %p62
      %p69 = scmp.eq.s32.totalorder %s15, 1
      %p70 = por %p68, %p69
      %p71 = scmp.ne.s32.totalorder %s63, %s66
      %p72 = scmp.eq.s32.totalorder %s15, 0
      %p73 = por %p71, %p72
      %p74 = scmp.ne.s32.totalorder %s63, %s66
      %p75 = scmp.eq.s32.totalorder %s20, 1
      %p76 = por %p74, %p75
      %p77 = scmp.ne.s32.totalorder %s66, %s67
      %p78 = scmp.eq.s32.totalorder %s20, 0
      %p79 = por %p77, %p78
      %p80 = scmp.ne.s32.totalorder %s66, %s67
      %p81 = scmp.eq.s32.totalorder %s21, 1
      %p82 = por %p80, %p81
      %p84 = scmp.ne.s32.totalorder %s67, %s83
      %p85 = scmp.eq.s32.totalorder %s21, 0
      %p86 = por %p84, %p85
      %s87 = ssub.s32 %s23, %s30
      %p88 = scmp.eq.s32.totalorder %s87, 0
      %s90 = sadd.s32 %s89, 1
      %s91 = scalar_select %p88, %s89, %s90
      %p94 = pneg %p88
      %p95 = scmp.eq.s32.totalorder %s15, 1
      %p96 = por %p94, %p95
      %p97 = scmp.ne.s32.totalorder %s89, %s92
      %p98 = scmp.eq.s32.totalorder %s15, 0
      %p99 = por %p97, %p98
      %p100 = scmp.ne.s32.totalorder %s89, %s92
      %p101 = scmp.eq.s32.totalorder %s20, 1
      %p102 = por %p100, %p101
      %p103 = scmp.ne.s32.totalorder %s92, %s93
      %p104 = scmp.eq.s32.totalorder %s20, 0
      %p105 = por %p103, %p104
      %p106 = scmp.ne.s32.totalorder %s92, %s93
      %p107 = scmp.eq.s32.totalorder %s21, 1
      %p108 = por %p106, %p107
      %p110 = scmp.ne.s32.totalorder %s93, %s109
      %p111 = scmp.eq.s32.totalorder %s21, 0
      %p112 = por %p110, %p111
      %s113 = ssub.s32 %s22, %s34
      %s114 = ssub.s32 %s23, %s30
      %s115 = sor.u32 %s113, %s114
      %p116 = scmp.eq.s32.totalorder %s115, 0
      %s118 = sadd.s32 %s117, 1
      %s119 = scalar_select %p116, %s117, %s118
      %p122 = pneg %p116
      %p123 = scmp.eq.s32.totalorder %s15, 1
      %p124 = por %p122, %p123
      %p125 = scmp.ne.s32.totalorder %s117, %s120
      %p126 = scmp.eq.s32.totalorder %s15, 0
      %p127 = por %p125, %p126
      %p128 = scmp.ne.s32.totalorder %s117, %s120
      %p129 = scmp.eq.s32.totalorder %s20, 1
      %p130 = por %p128, %p129
      %p131 = scmp.ne.s32.totalorder %s120, %s121
      %p132 = scmp.eq.s32.totalorder %s20, 0
      %p133 = por %p131, %p132
      %p134 = scmp.ne.s32.totalorder %s120, %s121
      %p135 = scmp.eq.s32.totalorder %s21, 1
      %p136 = por %p134, %p135
      %p138 = scmp.ne.s32.totalorder %s121, %s137
      %p139 = scmp.eq.s32.totalorder %s21, 0
      %p140 = por %p138, %p139
      %p141 = scmp.le.s32.totalorder 1, %s15
      %p142 = scmp.lt.s32.totalorder %s15, 3
      %p143 = pnand %p141, %p142
      %p144 = pneg %p143
      // Predicated region
      $region9: #{tpu_custom_call.1} parent=5 // pred_check
        _
      $region10: #{tpu_custom_call.1} parent=5 // pred_check_branch
        %146 = sbr.rel (%p143) target = $region12
      $region11: #{tpu_custom_call.1} parent=5 // pred_region
        %s147 = ssub.s32 %s15, 1
        // Predicated region
        $region13: #{tpu_custom_call.1} parent=11 // pred_check
          %p148 = pneg %p79
        $region14: #{tpu_custom_call.1} parent=11 // pred_check_branch
          %150 = sbr.rel (%p148) target = $region16
        $region15: #{tpu_custom_call.1} parent=11 // pred_region
          %p151 = scmp.lt.s32.totalorder %s25, 0
          %s152 = scalar_select %p151, %s25, 0
          %s153 = smul.addr %s152, 8
          %s154 = scalar_lea.vmem %s1, %s153
        $region16: #{tpu_custom_call.1} parent=11 // pred_fallthru
          _
        // Predicated region
        $region17: #{tpu_custom_call.1} parent=11 // pred_check
          %p155 = pneg %p105
        $region18: #{tpu_custom_call.1} parent=11 // pred_check_branch
          %157 = sbr.rel (%p155) target = $region20
        $region19: #{tpu_custom_call.1} parent=11 // pred_region
          %p158 = scmp.lt.s32.totalorder %s25, 0
          %s159 = scalar_select %p158, %s25, 0
          %s160 = smul.addr %s159, 8
          %s161 = scalar_lea.vmem %s2, %s160
        $region20: #{tpu_custom_call.1} parent=11 // pred_fallthru
          _
      $region12: #{tpu_custom_call.1} parent=5 // pred_fallthru
        _
      %p162 = scmp.lt.s32.totalorder %s15, 2
      // Predicated region
      $region21: #{tpu_custom_call.1} parent=5 // pred_check
        %p163 = pneg %p162
      $region22: #{tpu_custom_call.1} parent=5 // pred_check_branch
        %165 = sbr.rel (%p163) target = $region24
      $region23: #{tpu_custom_call.1} parent=5 // pred_region
        // Predicated region
        $region25: #{tpu_custom_call.1} parent=23 // pred_check
          %p166 = pneg %p47
        $region26: #{tpu_custom_call.1} parent=23 // pred_check_branch
          %168 = sbr.rel (%p166) target = $region28
        $region27: #{tpu_custom_call.1} parent=23 // pred_region
          %s169 = sand.u32 %s37, 1
          %s170 = scalar_lea.sflag [#allocation4], %s169
          %s171 = sand.u32 %s37, 1
          %s172 = smul.addr %s171, 24
          %s173 = scalar_lea.vmem [#allocation3], %s172
          %175 = vsyncadd %s170, 0
          %s176 = smul.addr %s22, 3
          %s177 = smul.addr %s176, 8
          %s178 = scalar_lea.hbm %s0, %s177
          %s180 = sshll.u32 %s178, 4
          %s181 = int_to_ptr.hbm [resolvable:$true] %s180
          %s182 = sshll.u32 %s173, 4
          %s183 = int_to_ptr.vmem [resolvable:$true] %s182
          %185 = dma.hbm_to_vmem [thread:$0]  %s181, 384, %s183, %s170
        $region28: #{tpu_custom_call.1} parent=23 // pred_fallthru
          _
      $region24: #{tpu_custom_call.1} parent=5 // pred_fallthru
        _
      %p186 = scmp.le.s32.totalorder 1, %s15
      %p187 = scmp.lt.s32.totalorder %s15, 3
      %p188 = pnand %p186, %p187
      %p189 = pneg %p188
      // Predicated region
      $region29: #{tpu_custom_call.1} parent=5 // pred_check
        _
      $region30: #{tpu_custom_call.1} parent=5 // pred_check_branch
        %191 = sbr.rel (%p188) target = $region32
      $region31: #{tpu_custom_call.1} parent=5 // pred_region
        %s192 = ssub.s32 %s15, 1
        %s193 = sand.u32 %s40, 1
        %s194 = scalar_lea.sflag [#allocation4], %s193
        %s195 = sand.u32 %s40, 1
        %s196 = smul.addr %s195, 24
        %s197 = scalar_lea.vmem [#allocation3], %s196
        // Predicated region
        $region33: #{tpu_custom_call.1} parent=31 // pred_check
          %p198 = pneg %p53
        $region34: #{tpu_custom_call.1} parent=31 // pred_check_branch
          %200 = sbr.rel (%p198) target = $region36
        $region35: #{tpu_custom_call.1} parent=31 // pred_region
          %202 = dma.done %s194, 384
        $region36: #{tpu_custom_call.1} parent=31 // pred_fallthru
          _
        %s203 = sand.u32 %s40, 1
        %s204 = scalar_lea.sflag [#allocation4], %s203
        %s205 = sand.u32 %s40, 1
        %s206 = smul.addr %s205, 24
        %s207 = scalar_lea.vmem [#allocation3], %s206
        %p208 = pneg %p53
        %p209 = pneg %p50
        %p210 = scmp.lt.s32.totalorder %s25, 0
        %s211 = scalar_select %p210, %s25, 0
        %s212 = smul.addr %s211, 8
        %s213 = scalar_lea.vmem %s1, %s212
        %p214 = pneg %p79
        %p215 = pneg %p76
        %p216 = scmp.lt.s32.totalorder %s25, 0
        %s217 = scalar_select %p216, %s25, 0
        %s218 = smul.addr %s217, 8
        %s219 = scalar_lea.vmem %s2, %s218
        %p220 = pneg %p105
        %p221 = pneg %p102
        %p222 = pneg %p133
        %p223 = pneg %p130
        %s224 = sand.u32 %s120, 1
        %s225 = scalar_lea.sflag [#allocation5], %s224
        %s226 = sand.u32 %s120, 1
        %s227 = smul.addr %s226, 24
        %s228 = scalar_lea.vmem [#allocation6], %s227
        %p229 = scmp.lt.s32.totalorder %s25, 0
        %s230 = scalar_select %p229, %s25, 0
        %s231 = smul.addr %s230, 8
        %s232 = scalar_lea.vmem %s1, %s231
        %p233 = scmp.lt.s32.totalorder %s25, 0
        %s234 = scalar_select %p233, %s25, 0
        %s235 = smul.addr %s234, 8
        %s236 = scalar_lea.vmem %s2, %s235
        %v237 = vld [vmem:[%s197] sm:$0xff]
        %v238 = vld [vmem:[%s197 + $0x8] sm:$0xff]
        %v239 = vld [vmem:[%s197 + $0x10] sm:$0xff]
        %240 = vst [vmem:[#allocation2] sm:$0xff] %v237
        %241 = vst [vmem:[#allocation2 + $0x8] sm:$0xff] %v238
        %242 = vst [vmem:[#allocation2 + $0x10] sm:$0xff] %v239
        %246 = vrot.lane.b32.xlu0 %v237, 127
        %v247 = vpop.permute.xlu0 %246
        %248 = vrot.lane.b32.xlu0 %v238, 127
        %v249 = vpop.permute.xlu0 %248
        %250 = vrot.lane.b32.xlu0 %v239, 127
        %v251 = vpop.permute.xlu0 %250
        %vm252 = vcmask 1039360
        %v253 = vsel %vm252, %v247, %v249
        %v254 = vsel %vm252, %v249, %v251
        %v259 = vsel %vm252, %v251, %v247
        %260 = vst [vmem:[#allocation2 + $0x18] sm:$0xff] %v253
        %261 = vst [vmem:[#allocation2 + $0x20] sm:$0xff] %v254
        %262 = vst [vmem:[#allocation2 + $0x28] sm:$0xff] %v259
        %263 = vrot.lane.b32.xlu0 %v237, 126
        %v264 = vpop.permute.xlu0 %263
        %265 = vrot.lane.b32.xlu0 %v238, 126
        %v266 = vpop.permute.xlu0 %265
        %267 = vrot.lane.b32.xlu0 %v239, 126
        %v268 = vpop.permute.xlu0 %267
        %vm269 = vcmask 1031168
        %v270 = vsel %vm269, %v264, %v266
        %v271 = vsel %vm269, %v266, %v268
        %v276 = vsel %vm269, %v268, %v264
        %277 = vst [vmem:[#allocation2 + $0x30] sm:$0xff] %v270
        %278 = vst [vmem:[#allocation2 + $0x38] sm:$0xff] %v271
        %279 = vst [vmem:[#allocation2 + $0x40] sm:$0xff] %v276
        %280 = vrot.lane.b32.xlu0 %v237, 110
        %v281 = vpop.permute.xlu0 %280
        %282 = vrot.lane.b32.xlu0 %v238, 110
        %v283 = vpop.permute.xlu0 %282
        %284 = vrot.lane.b32.xlu0 %v239, 110
        %v285 = vpop.permute.xlu0 %284
        %vm286 = vcmask 900096
        %v287 = vsel %vm286, %v281, %v283
        %v288 = vsel %vm286, %v283, %v285
        %v293 = vsel %vm286, %v285, %v281
        %294 = vst [vmem:[#allocation2 + $0x48] sm:$0xff] %v287
        %295 = vst [vmem:[#allocation2 + $0x50] sm:$0xff] %v288
        %296 = vst [vmem:[#allocation2 + $0x58] sm:$0xff] %v293
        %297 = vrot.lane.b32.xlu0 %v237, 109
        %v298 = vpop.permute.xlu0 %297
        %299 = vrot.lane.b32.xlu0 %v238, 109
        %v300 = vpop.permute.xlu0 %299
        %301 = vrot.lane.b32.xlu0 %v239, 109
        %v302 = vpop.permute.xlu0 %301
        %vm303 = vcmask 891904
        %v304 = vsel %vm303, %v298, %v300
        %v305 = vsel %vm303, %v300, %v302
        %v310 = vsel %vm303, %v302, %v298
        %311 = vst [vmem:[#allocation2 + $0x60] sm:$0xff] %v304
        %312 = vst [vmem:[#allocation2 + $0x68] sm:$0xff] %v305
        %313 = vst [vmem:[#allocation2 + $0x70] sm:$0xff] %v310
        %314 = vrot.lane.b32.xlu0 %v237, 108
        %v315 = vpop.permute.xlu0 %314
        %316 = vrot.lane.b32.xlu0 %v238, 108
        %v317 = vpop.permute.xlu0 %316
        %318 = vrot.lane.b32.xlu0 %v239, 108
        %v319 = vpop.permute.xlu0 %318
        %vm320 = vcmask 883712
        %v321 = vsel %vm320, %v315, %v317
        %v322 = vsel %vm320, %v317, %v319
        %v327 = vsel %vm320, %v319, %v315
        %328 = vst [vmem:[#allocation2 + $0x78] sm:$0xff] %v321
        %329 = vst [vmem:[#allocation2 + $0x80] sm:$0xff] %v322
        %330 = vst [vmem:[#allocation2 + $0x88] sm:$0xff] %v327
        %331 = vrot.lane.b32.xlu0 %v237, 92
        %v332 = vpop.permute.xlu0 %331
        %333 = vrot.lane.b32.xlu0 %v238, 92
        %v334 = vpop.permute.xlu0 %333
        %335 = vrot.lane.b32.xlu0 %v239, 92
        %v336 = vpop.permute.xlu0 %335
        %vm337 = vcmask 752640
        %v338 = vsel %vm337, %v332, %v334
        %v339 = vsel %vm337, %v334, %v336
        %v344 = vsel %vm337, %v336, %v332
        %345 = vst [vmem:[#allocation2 + $0x90] sm:$0xff] %v338
        %346 = vst [vmem:[#allocation2 + $0x98] sm:$0xff] %v339
        %347 = vst [vmem:[#allocation2 + $0xa0] sm:$0xff] %v344
        %348 = vrot.lane.b32.xlu0 %v237, 91
        %v349 = vpop.permute.xlu0 %348
        %350 = vrot.lane.b32.xlu0 %v238, 91
        %v351 = vpop.permute.xlu0 %350
        %352 = vrot.lane.b32.xlu0 %v239, 91
        %v353 = vpop.permute.xlu0 %352
        %vm354 = vcmask 744448
        %v355 = vsel %vm354, %v349, %v351
        %v356 = vsel %vm354, %v351, %v353
        %v361 = vsel %vm354, %v353, %v349
        %362 = vst [vmem:[#allocation2 + $0xa8] sm:$0xff] %v355
        %363 = vst [vmem:[#allocation2 + $0xb0] sm:$0xff] %v356
        %364 = vst [vmem:[#allocation2 + $0xb8] sm:$0xff] %v361
        %365 = vrot.lane.b32.xlu0 %v237, 90
        %v366 = vpop.permute.xlu0 %365
        %367 = vrot.lane.b32.xlu0 %v238, 90
        %v368 = vpop.permute.xlu0 %367
        %369 = vrot.lane.b32.xlu0 %v239, 90
        %v370 = vpop.permute.xlu0 %369
        %vm371 = vcmask 736256
        %v372 = vsel %vm371, %v366, %v368
        %v373 = vsel %vm371, %v368, %v370
        %v378 = vsel %vm371, %v370, %v366
        %379 = vst [vmem:[#allocation2 + $0xc0] sm:$0xff] %v372
        %380 = vst [vmem:[#allocation2 + $0xc8] sm:$0xff] %v373
        %381 = vst [vmem:[#allocation2 + $0xd0] sm:$0xff] %v378
        %v382 = vld [vmem:[%s232] sm:$0xff]
        %v383 = vld [vmem:[#allocation2] sm:$0xff]
        %v384 = vld [vmem:[#allocation2 + $0x8] sm:$0xff]
        %v385 = vld [vmem:[#allocation2 + $0x10] sm:$0xff]
        %v386 = vld [vmem:[#allocation2 + $0x18] sm:$0xff]
        %v387 = vld [vmem:[#allocation2 + $0x20] sm:$0xff]
        %v388 = vld [vmem:[#allocation2 + $0x28] sm:$0xff]
        %v389 = vld [vmem:[#allocation2 + $0x30] sm:$0xff]
        %v390 = vld [vmem:[#allocation2 + $0x38] sm:$0xff]
        %v391 = vld [vmem:[#allocation2 + $0x40] sm:$0xff]
        %v392 = vld [vmem:[#allocation2 + $0x48] sm:$0xff]
        %v393 = vld [vmem:[#allocation2 + $0x50] sm:$0xff]
        %v394 = vld [vmem:[#allocation2 + $0x58] sm:$0xff]
        %v395 = vld [vmem:[#allocation2 + $0x60] sm:$0xff]
        %v396 = vld [vmem:[#allocation2 + $0x68] sm:$0xff]
        %v397 = vld [vmem:[#allocation2 + $0x70] sm:$0xff]
        %v398 = vld [vmem:[#allocation2 + $0x78] sm:$0xff]
        %v399 = vld [vmem:[#allocation2 + $0x80] sm:$0xff]
        %v400 = vld [vmem:[#allocation2 + $0x88] sm:$0xff]
        %v401 = vld [vmem:[#allocation2 + $0x90] sm:$0xff]
        %v402 = vld [vmem:[#allocation2 + $0x98] sm:$0xff]
        %v403 = vld [vmem:[#allocation2 + $0xa0] sm:$0xff]
        %v404 = vld [vmem:[#allocation2 + $0xa8] sm:$0xff]
        %v405 = vld [vmem:[#allocation2 + $0xb0] sm:$0xff]
        %v406 = vld [vmem:[#allocation2 + $0xb8] sm:$0xff]
        %v407 = vld [vmem:[#allocation2 + $0xc0] sm:$0xff]
        %v408 = vld [vmem:[#allocation2 + $0xc8] sm:$0xff]
        %v409 = vld [vmem:[#allocation2 + $0xd0] sm:$0xff]
        %v410 = vld [vmem:[%s236] sm:$0xff]
        %412 = vset.pattern.permute.xlu0 0
        %413 = vperm.xlu0 %412, %v410
        %v414 = vpop.permute.xlu0 %413
        %vm416 = vcmask 588800
        %v418 = vsel %vm416, %v382, 0
        %420 = vmatpush.msra.mxu0 0.0
        %421 = vmatpush.msra.mxu0 0.0
        %422 = vmatpush.msra.mxu0 0.0
        %423 = vmatpush.msra.mxu0 0.0
        %424 = vmatpush.msra.mxu0 0.0
        %425 = vmatpush.msra.mxu0 0.0
        %426 = vmatpush.msra.mxu0 0.0
        %427 = vmatpush.msra.mxu0 %v407
        %428 = vmatpush.msra.mxu0 %v404
        %429 = vmatpush.msra.mxu0 %v401
        %430 = vmatpush.msra.mxu0 %v398
        %431 = vmatpush.msra.mxu0 %v395
        %432 = vmatpush.msra.mxu0 %v392
        %433 = vmatpush.msra.mxu0 %v389
        %434 = vmatpush.msra.mxu0 %v386
        %435 = vmatpush.msra.mxu0 %v383
        %436 = vmatmul.f32.gmra.mxu0 %v418
        %v437 = vpop.f32.mrf.mxu0
        %v438 = vadd.f32 %v414, %v437
        %439 = vdwg.mxu0
        %440 = vmatpush.msra.mxu0 0.0
        %441 = vmatpush.msra.mxu0 0.0
        %442 = vmatpush.msra.mxu0 0.0
        %443 = vmatpush.msra.mxu0 0.0
        %444 = vmatpush.msra.mxu0 0.0
        %445 = vmatpush.msra.mxu0 0.0
        %446 = vmatpush.msra.mxu0 0.0
        %447 = vmatpush.msra.mxu0 %v408
        %448 = vmatpush.msra.mxu0 %v405
        %449 = vmatpush.msra.mxu0 %v402
        %450 = vmatpush.msra.mxu0 %v399
        %451 = vmatpush.msra.mxu0 %v396
        %452 = vmatpush.msra.mxu0 %v393
        %453 = vmatpush.msra.mxu0 %v390
        %454 = vmatpush.msra.mxu0 %v387
        %455 = vmatpush.msra.mxu0 %v384
        %456 = vmatmul.f32.gmra.mxu0 %v418
        %v457 = vpop.f32.mrf.mxu0
        %v458 = vadd.f32 %v414, %v457
        %459 = vdwg.mxu0
        %460 = vmatpush.msra.mxu0 0.0
        %461 = vmatpush.msra.mxu0 0.0
        %462 = vmatpush.msra.mxu0 0.0
        %463 = vmatpush.msra.mxu0 0.0
        %464 = vmatpush.msra.mxu0 0.0
        %465 = vmatpush.msra.mxu0 0.0
        %466 = vmatpush.msra.mxu0 0.0
        %467 = vmatpush.msra.mxu0 %v409
        %468 = vmatpush.msra.mxu0 %v406
        %469 = vmatpush.msra.mxu0 %v403
        %470 = vmatpush.msra.mxu0 %v400
        %471 = vmatpush.msra.mxu0 %v397
        %472 = vmatpush.msra.mxu0 %v394
        %473 = vmatpush.msra.mxu0 %v391
        %474 = vmatpush.msra.mxu0 %v388
        %475 = vmatpush.msra.mxu0 %v385
        %476 = vmatmul.f32.gmra.mxu0 %v418
        %v477 = vpop.f32.mrf.mxu0
        %v478 = vadd.f32 %v414, %v477
        %479 = vdwg.mxu0
        %v480 = vmax.f32 %v438, 0.0
        %v481 = vmax.f32 %v458, 0.0
        %v482 = vmax.f32 %v478, 0.0
        %483 = vst [vmem:[%s228] sm:$0xff] %v480
        %484 = vst [vmem:[%s228 + $0x8] sm:$0xff] %v481
        %485 = vst [vmem:[%s228 + $0x10] sm:$0xff] %v482
        %s486 = sand.u32 %s120, 1
        %s487 = scalar_lea.sflag [#allocation5], %s486
        %s488 = sand.u32 %s120, 1
        %s489 = smul.addr %s488, 24
        %s490 = scalar_lea.vmem [#allocation6], %s489
        // Predicated region
        $region37: #{tpu_custom_call.1} parent=31 // pred_check
          %p491 = pneg %p130
        $region38: #{tpu_custom_call.1} parent=31 // pred_check_branch
          %493 = sbr.rel (%p491) target = $region40
        $region39: #{tpu_custom_call.1} parent=31 // pred_region
          %495 = vsyncadd %s487, 0
          %s496 = smul.addr %s25, 3
          %s497 = smul.addr %s24, 3
          %s498 = sadd.s32 %s496, %s497
          %s499 = smul.addr %s498, 8
          %s500 = scalar_lea.hbm %s3, %s499
          %s502 = sshll.u32 %s490, 4
          %s503 = int_to_ptr.vmem [resolvable:$true] %s502
          %s504 = sshll.u32 %s500, 4
          %s505 = int_to_ptr.hbm [resolvable:$true] %s504
          %507 = dma.vmem_to_hbm [thread:$0]  %s503, 384, %s505, %s487
        $region40: #{tpu_custom_call.1} parent=31 // pred_fallthru
          _
      $region32: #{tpu_custom_call.1} parent=5 // pred_fallthru
        _
      %p508 = scmp.le.s32.totalorder 2, %s15
      // Predicated region
      $region41: #{tpu_custom_call.1} parent=5 // pred_check
        %p509 = pneg %p508
      $region42: #{tpu_custom_call.1} parent=5 // pred_check_branch
        %511 = sbr.rel (%p509) target = $region44
      $region43: #{tpu_custom_call.1} parent=5 // pred_region
        %s512 = ssub.s32 %s15, 2
        // Predicated region
        $region45: #{tpu_custom_call.1} parent=43 // pred_check
          %p513 = pneg %p136
        $region46: #{tpu_custom_call.1} parent=43 // pred_check_branch
          %515 = sbr.rel (%p513) target = $region48
        $region47: #{tpu_custom_call.1} parent=43 // pred_region
          %s516 = sand.u32 %s121, 1
          %s517 = scalar_lea.sflag [#allocation5], %s516
          %s518 = sand.u32 %s121, 1
          %s519 = smul.addr %s518, 24
          %s520 = scalar_lea.vmem [#allocation6], %s519
          %522 = dma.done %s517, 384
        $region48: #{tpu_custom_call.1} parent=43 // pred_fallthru
          _
      $region44: #{tpu_custom_call.1} parent=5 // pred_fallthru
        _
    $region6: #{tpu_custom_call.1} parent=1 // loop_footer
      %s19 = sadd.s32 1, %s15
    $region7: #{tpu_custom_call.1} parent=1 // loop_footer_branch
      %14 = sbr.rel target = $region3
    $region8: #{tpu_custom_call.1} parent=1 // loop_exit
      _
    %523 = vsyncpa [#allocation4], 1
    %s524 = scalar_lea.sflag [#allocation4], 1
    %525 = vsyncpa %s524, 1
    %526 = vsyncpa [#allocation5], 1
    %s527 = scalar_lea.sflag [#allocation5], 1
    %528 = vsyncpa %s527, 1

</llo_original>
